<compile_context>
chip_gen: v5e
topology: v5e:2x2
jax: 0.10.0
libtpu: 0.0.40
codegen_flags: <defaults>
</compile_context>

<pallas_src>
import numpy as np
import jax
import jax.numpy as jnp
from jax.experimental import pallas as pl
from jax.experimental.pallas import tpu as pltpu


# ----------------------------------------------------------------------------
# Host-side glue: sincos 2D positional embedding (same math as diffusers).
# ----------------------------------------------------------------------------
def _get_1d_sincos_pos_embed_from_grid(embed_dim, pos):
    omega = np.arange(embed_dim // 2, dtype=np.float64)
    omega /= embed_dim / 2.0
    omega = 1.0 / 10000 ** omega                      # (D/2,)
    pos = pos.reshape(-1)                             # (M,)
    out = np.einsum("m,d->md", pos, omega)            # (M, D/2)
    return np.concatenate([np.sin(out), np.cos(out)], axis=1)  # (M, D)


def get_2d_sincos_pos_embed(embed_dim, grid_size, base_size=16, lewei_scale=1.0):
    if isinstance(grid_size, int):
        grid_size = (grid_size, grid_size)
    grid_h = np.arange(grid_size[0], dtype=np.float32) / (grid_size[0] / base_size) / lewei_scale
    grid_w = np.arange(grid_size[1], dtype=np.float32) / (grid_size[1] / base_size) / lewei_scale
    grid = np.meshgrid(grid_w, grid_h)                # w goes first (diffusers convention)
    grid = np.stack(grid, axis=0)
    grid = grid.reshape([2, 1, grid_size[1], grid_size[0]])
    emb_h = _get_1d_sincos_pos_embed_from_grid(embed_dim // 2, grid[0])
    emb_w = _get_1d_sincos_pos_embed_from_grid(embed_dim // 2, grid[1])
    return np.concatenate([emb_h, emb_w], axis=1)     # (H*W, D)


# ----------------------------------------------------------------------------
# Pallas kernel: fused patch-projection matmul + (bias + positional embedding).
# ----------------------------------------------------------------------------
def patch_embed_kernel(x_ref, w_ref, pos_ref, o_ref):
    # x_ref:   (TN, K)  bf16 patch tile for one batch element
    # w_ref:   (K, E)   bf16 projection weight (resident across the grid)
    # pos_ref: (TN, E)  pos_embed + bias tile (f32 or bf16; shared across batch steps)
    # o_ref:   (TN, E)  output tile
    acc = jnp.dot(x_ref[...], w_ref[...], preferred_element_type=jnp.float32)
    o_ref[...] = (acc + pos_ref[...].astype(jnp.float32)).astype(o_ref.dtype)
    # TODO(synk): layer_norm=True path (LayerNorm w/o affine applied before the
    # pos add, bias NOT folded into pos) not wired in; module default is False.


def _vmem_limit_bytes():
    """Generation-aware scoped-VMEM limit (v5e/v6e 128 MiB physical, v7x 64 MiB)."""
    cap = 64 << 20  # conservative fallback = v7x per-core VMEM
    try:
        info = pltpu.get_tpu_info()
        cap = int(getattr(info, "vmem_capacity_bytes", 0)) or cap
    except Exception:
        pass
    return int(min(cap * 3 // 4, 100 << 20))


def _largest_aligned_divisor(n, cap, align):
    t = (min(cap, n) // align) * align
    while t >= align:
        if n % t == 0:
            return t
        t -= align
    return 0


def _pick_patch_tile(n, cap):
    """Largest divisor of n under `cap`; prefer multiples of 16 (bf16 sublane
    packing), then 8, then any divisor (handles ragged / non-square grids
    without falling back to a VMEM-blowing tn=N block)."""
    cap = max(1, min(cap, n))
    for align in (16, 8):
        t = _largest_aligned_divisor(n, cap, align)
        if t:
            return t
    for t in range(cap, 0, -1):
        if n % t == 0:
            return t
    return n


def patch_embed_forward(latent, weight, bias, pos_embed, patch_size,
                        *, compute_dtype=jnp.bfloat16, out_dtype=None):
    """PatchEmbed.forward with pos_embed_max_size=None, flatten=True,
    layer_norm=False, bias=True, pos_embed_type='sincos'.

    latent:    (B, C, H, W)  NCHW like the PyTorch Conv2d input
    weight:    (E, C, p, p)  Conv2d weight
    bias:      (E,)          Conv2d bias
    pos_embed: (N, E)        sincos positional embedding (N = (H/p)*(W/p))
    out_dtype: output dtype; None -> latent.dtype (matches the PyTorch module)
    returns:   (B, N, E)
    """
    B, C, H, W = latent.shape
    p = patch_size
    Hp, Wp = H // p, W // p
    N = Hp * Wp
    E = weight.shape[0]
    K = C * p * p
    out_dtype = jnp.dtype(latent.dtype if out_dtype is None else out_dtype)

    # Patchify (XLA glue): NCHW -> (B, Hp, Wp, C, p, p) -> (B, N, K).
    # Row order matches torch conv output .flatten(2).transpose(1, 2);
    # K ordering (c, ph, pw) matches weight.reshape(E, K).
    # TODO(synk): fuse this rearrange into the Pallas input DMA
    # (CompilerParams(allow_input_fusion=...)) to skip the extra HBM round trip
    # of the patch tensor; kept as a separate XLA op here for lowering safety.
    patches = (
        latent.reshape(B, C, Hp, p, Wp, p)
        .transpose(0, 2, 4, 1, 3, 5)
        .reshape(B, N, K)
        .astype(compute_dtype)
    )
    w2d = weight.reshape(E, K).T.astype(compute_dtype)            # (K, E)

    # Fold bias into the pos_embed table (legal for the layer_norm=False path).
    # Keep it bf16 only when the output stream is bf16 (precision gate).
    pos_dtype = jnp.bfloat16 if out_dtype == jnp.dtype(jnp.bfloat16) else jnp.float32
    pos_plus_bias = (
        pos_embed.astype(jnp.float32) + bias.astype(jnp.float32)[None, :]
    ).astype(pos_dtype)                                            # (N, E)

    # ---- VMEM budgeting (generation-aware) --------------------------------
    vmem_limit = _vmem_limit_bytes()
    patch_b = jnp.dtype(compute_dtype).itemsize
    pos_b = jnp.dtype(pos_dtype).itemsize
    out_b = out_dtype.itemsize
    weight_bytes = 2 * K * E * patch_b                 # resident weight, double-buffered
    budget = max(4 << 20, vmem_limit - weight_bytes - (2 << 20))   # 2 MiB slack
    row_bytes = 2 * (K * patch_b + E * (pos_b + out_b))            # 2 buffers / stream
    tn = _pick_patch_tile(N, budget // max(row_bytes, 1))

    grid = (N // tn, B)  # batch is the minor axis -> pos tile DMA reused across b

    out = pl.pallas_call(
        patch_embed_kernel,
        out_shape=jax.ShapeDtypeStruct((B, N, E), out_dtype),
        grid=grid,
        in_specs=[
            # patches: squeeze the batch dim, tile over patch rows, full K.
            pl.BlockSpec((None, tn, K), lambda n, b: (b, n, 0)),
            # weight: resident (constant block index -> fetched once).
            pl.BlockSpec((K, E), lambda n, b: (0, 0)),
            # pos+bias: indexed by the patch-row tile only (no Bx replication).
            pl.BlockSpec((tn, E), lambda n, b: (n, 0)),
        ],
        out_specs=pl.BlockSpec((None, tn, E), lambda n, b: (b, n, 0)),
        compiler_params=pltpu.CompilerParams(
            # N-tile axis parallel (sharded across v7x cores, disjoint pos reads),
            # batch axis sequential so the pos block DMA is skipped across b.
            dimension_semantics=("parallel", "arbitrary"),
            vmem_limit_bytes=vmem_limit,
        ),
    )(patches, w2d, pos_plus_bias)

    return out


if __name__ == "__main__":
    # Small config consistent with the module:
    #   height=width=16, patch_size=8, in_channels=4, embed_dim=32
    #   -> num_patches = 2*2 = 4, grid_size = 2, base_size = 2
    B, C, H, W = 2, 4, 16, 16
    patch_size = 8
    embed_dim = 32
    Hp, Wp = H // patch_size, W // patch_size
    N = Hp * Wp
    K = C * patch_size * patch_size

    key = jax.random.PRNGKey(0)
    k_x, k_w, k_b = jax.random.split(key, 3)
    x = jax.random.normal(k_x, (B, C, H, W), dtype=jnp.float32)
    weight = jax.random.normal(k_w, (embed_dim, C, patch_size, patch_size), dtype=jnp.float32) * 0.02
    bias = jax.random.normal(k_b, (embed_dim,), dtype=jnp.float32) * 0.02

    pos_np = get_2d_sincos_pos_embed(
        embed_dim, int(N ** 0.5), base_size=H // patch_size, lewei_scale=1.0
    )  # (N, E)
    pos_embed = jnp.asarray(pos_np, dtype=jnp.float32)

    # --- default path: out dtype follows latent (f32), pos kept in f32 ------
    out = patch_embed_forward(x, weight, bias, pos_embed, patch_size)
    out = jax.block_until_ready(out)

    # Reference (pure JAX, same bf16 rounding of matmul inputs, f32 accumulate).
    patches_ref = (
        x.reshape(B, C, Hp, patch_size, Wp, patch_size)
        .transpose(0, 2, 4, 1, 3, 5)
        .reshape(B * N, K)
        .astype(jnp.bfloat16)
        .astype(jnp.float32)
    )
    w_ref = weight.reshape(embed_dim, K).T.astype(jnp.bfloat16).astype(jnp.float32)
    ref = patches_ref @ w_ref + bias[None, :]
    ref = ref.reshape(B, N, embed_dim) + pos_embed[None, :, :]

    assert out.shape == (B, N, embed_dim)
    assert out.dtype == x.dtype
    assert jnp.allclose(out, ref, atol=1e-3, rtol=1e-3)

    # --- bf16 output path: exercises the bf16 pos/output streams ------------
    out_bf16 = patch_embed_forward(x, weight, bias, pos_embed, patch_size,
                                   out_dtype=jnp.bfloat16)
    out_bf16 = jax.block_until_ready(out_bf16)
    assert out_bf16.shape == (B, N, embed_dim)
    assert out_bf16.dtype == jnp.bfloat16
    assert jnp.allclose(out_bf16.astype(jnp.float32), ref, atol=3e-2, rtol=3e-2)

    print("KERNEL_OK")
</pallas_src>

<mosaic_0001>
module attributes {stable_mosaic.version = 11 : i64} {
  func.func @patch_embed_kernel(%arg0: i32, %arg1: i32, %arg2: memref<1x4x256xbf16, #tpu.memory_space<vmem>>, %arg3: memref<256x32xbf16, #tpu.memory_space<vmem>>, %arg4: memref<4x32xf32, #tpu.memory_space<vmem>>, %arg5: memref<1x4x32xf32, #tpu.memory_space<vmem>>) attributes {dimension_semantics = [#tpu.dimension_semantics<parallel>, #tpu.dimension_semantics<arbitrary>], iteration_bounds = array<i64: 1, 2>, scalar_prefetch = 0 : i64, scratch_operands = 0 : i64, tpu.core_type = #tpu.core_type<tc>, window_params = [{transform_indices = @transform_0, window_bounds = array<i64: 1, 4, 256>}, {pipeline_mode = #tpu.pipeline_mode<synchronous>, transform_indices = @transform_1, window_bounds = array<i64: 256, 32>}, {transform_indices = @transform_2, window_bounds = array<i64: 4, 32>}, {transform_indices = @transform_3, window_bounds = array<i64: 1, 4, 32>}]} {
    %c0 = arith.constant 0 : index
    %c0_0 = arith.constant 0 : index
    %c0_1 = arith.constant 0 : index
    %0 = vector.load %arg2[%c0, %c0_0, %c0_1] : memref<1x4x256xbf16, #tpu.memory_space<vmem>>, vector<1x4x256xbf16>
    %1 = vector.shape_cast %0 : vector<1x4x256xbf16> to vector<4x256xbf16>
    %c0_2 = arith.constant 0 : index
    %c0_3 = arith.constant 0 : index
    %2 = vector.load %arg3[%c0_2, %c0_3] : memref<256x32xbf16, #tpu.memory_space<vmem>>, vector<256x32xbf16>
    %cst = arith.constant dense<0.000000e+00> : vector<4x32xf32>
    %3 = tpu.matmul %1, %2, %cst {dimension_numbers = #tpu.dot_dimension_numbers<[1], [0], [0], [1], [0, 0, 1, 1], [], []>} : vector<4x256xbf16>, vector<256x32xbf16>, vector<4x32xf32> -> vector<4x32xf32>
    %c0_4 = arith.constant 0 : index
    %c0_5 = arith.constant 0 : index
    %4 = vector.load %arg4[%c0_4, %c0_5] : memref<4x32xf32, #tpu.memory_space<vmem>>, vector<4x32xf32>
    %5 = arith.addf %3, %4 : vector<4x32xf32>
    %c0_6 = arith.constant 0 : index
    %c0_7 = arith.constant 0 : index
    %c0_8 = arith.constant 0 : index
    %6 = vector.load %arg5[%c0_6, %c0_7, %c0_8] : memref<1x4x32xf32, #tpu.memory_space<vmem>>, vector<1x4x32xf32>
    %7 = vector.shape_cast %6 : vector<1x4x32xf32> to vector<4x32xf32>
    %8 = vector.shape_cast %5 : vector<4x32xf32> to vector<1x4x32xf32>
    tpu.vector_store %arg5[%c0_6, %c0_7, %c0_8], %8 {strides = array<i32>} : memref<1x4x32xf32, #tpu.memory_space<vmem>>, vector<1x4x32xf32>,
    return
  }
  func.func @transform_0(%arg0: i32, %arg1: i32) -> (i32, i32, i32) {
    %c0_i32 = arith.constant 0 : i32
    %c0_i32_0 = arith.constant 0 : i32
    return %arg1, %arg0, %c0_i32 : i32, i32, i32
  }
  func.func @transform_1(%arg0: i32, %arg1: i32) -> (i32, i32) {
    %c0_i32 = arith.constant 0 : i32
    %c0_i32_0 = arith.constant 0 : i32
    %c0_i32_1 = arith.constant 0 : i32
    return %c0_i32, %c0_i32_0 : i32, i32
  }
  func.func @transform_2(%arg0: i32, %arg1: i32) -> (i32, i32) {
    %c0_i32 = arith.constant 0 : i32
    %c0_i32_0 = arith.constant 0 : i32
    return %arg0, %c0_i32 : i32, i32
  }
  func.func @transform_3(%arg0: i32, %arg1: i32) -> (i32, i32, i32) {
    %c0_i32 = arith.constant 0 : i32
    %c0_i32_0 = arith.constant 0 : i32
    return %arg1, %arg0, %c0_i32 : i32, i32, i32
  }
}

</mosaic_0001>

<llo_original>
// kernel: tpu_custom_call.1
$region0: #{tpu_custom_call.1}
  #allocation0 [shape = 'u32[]', space=smem, size = 0x4, offset = 0x4, fixed_abs, tag = 'smem constant byte address 0x4 - core index']
  #allocation1 [shape = 'u32[72,128]{1,0:T(1,128)}', space=vmem, size = 0x9000, scoped, tag = 'internal scratch']
  %s0 = inlined_call_operand.vmem [shape: bf16[2,4,256], index: 0, kind: input, shape index: {}]
  %s1 = inlined_call_operand.vmem [shape: bf16[256,32], index: 1, kind: input, shape index: {}]
  %s2 = inlined_call_operand.vmem [shape: f32[4,32], index: 2, kind: input, shape index: {}]
  %s3 = inlined_call_operand.hbm [shape: f32[2,4,32], index: 3, kind: output, shape index: {}]
  %s4 = sld [smem:[#allocation0]]
  $region45: #{tpu_custom_call.1} parent=0
    _
  %s6 = ssub.s32 1, %s4
  %s7 = scalar_select 0, %s6, %s4
  $region1: #{tpu_custom_call.1} parent=0
    #allocation2 [shape = 'u8[4096]{0}', space=vmem, size = 0x1000, scoped, tag = 'output window, operand 0']
    #allocation3 [shape = 's32[2]{0}', space=sflag, size = 0x8, scoped, tag = 'scoped memory for tpu_custom_call.1']
    %8 = vsyncpa [#allocation3], 0
    %s9 = scalar_lea.sflag [#allocation3], 1
    %10 = vsyncpa %s9, 0
    loop: start=0, step=1, limit=4
    $region2: #{tpu_custom_call.1} parent=1 // loop_pre_header
      _
    $region3: #{tpu_custom_call.1} parent=1 // loop_header
      %s12 = sphi 0, %s16
      %p13 = scmp.ge.s32.totalorder %s12, 4
      %s19 = sphi 0, %s31
      %s20 = sphi 0, %s27
      %s21 = sphi 0, %s19
      %s22 = sphi 0, %s20
      %s23 = sphi 0, %s21
      %s24 = sphi 0, %s22
      %s36 = sphi 0, %s38
      %s39 = sphi 0, %s36
      %s40 = sphi 0, %s39
      %s56 = sphi 0, %s40
      %s60 = sphi 0, %s60
      %s62 = sphi 0, %s60
      %s63 = sphi 0, %s62
      %s77 = sphi 0, %s63
      %s83 = sphi 0, %s85
      %s86 = sphi 0, %s83
      %s87 = sphi 0, %s86
      %s103 = sphi 0, %s87
      %s111 = sphi 0, %s113
      %s114 = sphi 0, %s111
      %s115 = sphi 0, %s114
      %s131 = sphi 0, %s115
    $region4: #{tpu_custom_call.1} parent=1 // loop_header_branch
      %15 = sbr.rel (%p13) target = $region8
    $region5: #{tpu_custom_call.1} parent=1 // loop_body
      %s17 = ssub.s32 %s12, 1
      %s18 = ssub.s32 %s12, 2
      %s25 = sadd.s32 1, %s20
      %p26 = scmp.ge.s32.totalorder %s25, 2
      %s27 = scalar_select %p26, 0, %s25
      %s28 = sadd.s32 1, %s19
      %s29 = scalar_select %p26, %s28, %s19
      %p30 = scmp.ge.s32.totalorder %s29, 1
      %s31 = scalar_select %p30, 0, %s29
      %s32 = ssub.s32 %s20, %s27
      %s33 = ssub.s32 %s19, %s31
      %s34 = sor.u32 %s32, %s33
      %p35 = scmp.eq.s32.totalorder %s34, 0
      %s37 = sadd.s32 %s36, 1
      %s38 = scalar_select %p35, %s36, %s37
      %p41 = pneg %p35
      %p42 = scmp.eq.s32.totalorder %s12, 1
      %p43 = por %p41, %p42
      %p44 = scmp.ne.s32.totalorder %s36, %s39
      %p45 = scmp.eq.s32.totalorder %s12, 0
      %p46 = por %p44, %p45
      %p47 = scmp.ne.s32.totalorder %s36, %s39
      %p48 = scmp.eq.s32.totalorder %s17, 1
      %p49 = por %p47, %p48
      %p50 = scmp.ne.s32.totalorder %s39, %s40
      %p51 = scmp.eq.s32.totalorder %s17, 0
      %p52 = por %p50, %p51
      %p53 = scmp.ne.s32.totalorder %s39, %s40
      %p54 = scmp.eq.s32.totalorder %s18, 1
      %p55 = por %p53, %p54
      %p57 = scmp.ne.s32.totalorder %s40, %s56
      %p58 = scmp.eq.s32.totalorder %s18, 0
      %p59 = por %p57, %p58
      %s61 = sadd.s32 %s60, 1
      %p64 = scmp.eq.s32.totalorder %s12, 1
      %p65 = scmp.ne.s32.totalorder %s60, %s62
      %p66 = scmp.eq.s32.totalorder %s12, 0
      %p67 = por %p65, %p66
      %p68 = scmp.ne.s32.totalorder %s60, %s62
      %p69 = scmp.eq.s32.totalorder %s17, 1
      %p70 = por %p68, %p69
      %p71 = scmp.ne.s32.totalorder %s62, %s63
      %p72 = scmp.eq.s32.totalorder %s17, 0
      %p73 = por %p71, %p72
      %p74 = scmp.ne.s32.totalorder %s62, %s63
      %p75 = scmp.eq.s32.totalorder %s18, 1
      %p76 = por %p74, %p75
      %p78 = scmp.ne.s32.totalorder %s63, %s77
      %p79 = scmp.eq.s32.totalorder %s18, 0
      %p80 = por %p78, %p79
      %s81 = ssub.s32 %s19, %s31
      %p82 = scmp.eq.s32.totalorder %s81, 0
      %s84 = sadd.s32 %s83, 1
      %s85 = scalar_select %p82, %s83, %s84
      %p88 = pneg %p82
      %p89 = scmp.eq.s32.totalorder %s12, 1
      %p90 = por %p88, %p89
      %p91 = scmp.ne.s32.totalorder %s83, %s86
      %p92 = scmp.eq.s32.totalorder %s12, 0
      %p93 = por %p91, %p92
      %p94 = scmp.ne.s32.totalorder %s83, %s86
      %p95 = scmp.eq.s32.totalorder %s17, 1
      %p96 = por %p94, %p95
      %p97 = scmp.ne.s32.totalorder %s86, %s87
      %p98 = scmp.eq.s32.totalorder %s17, 0
      %p99 = por %p97, %p98
      %p100 = scmp.ne.s32.totalorder %s86, %s87
      %p101 = scmp.eq.s32.totalorder %s18, 1
      %p102 = por %p100, %p101
      %p104 = scmp.ne.s32.totalorder %s87, %s103
      %p105 = scmp.eq.s32.totalorder %s18, 0
      %p106 = por %p104, %p105
      %s107 = ssub.s32 %s20, %s27
      %s108 = ssub.s32 %s19, %s31
      %s109 = sor.u32 %s107, %s108
      %p110 = scmp.eq.s32.totalorder %s109, 0
      %s112 = sadd.s32 %s111, 1
      %s113 = scalar_select %p110, %s111, %s112
      %p116 = pneg %p110
      %p117 = scmp.eq.s32.totalorder %s12, 1
      %p118 = por %p116, %p117
      %p119 = scmp.ne.s32.totalorder %s111, %s114
      %p120 = scmp.eq.s32.totalorder %s12, 0
      %p121 = por %p119, %p120
      %p122 = scmp.ne.s32.totalorder %s111, %s114
      %p123 = scmp.eq.s32.totalorder %s17, 1
      %p124 = por %p122, %p123
      %p125 = scmp.ne.s32.totalorder %s114, %s115
      %p126 = scmp.eq.s32.totalorder %s17, 0
      %p127 = por %p125, %p126
      %p128 = scmp.ne.s32.totalorder %s114, %s115
      %p129 = scmp.eq.s32.totalorder %s18, 1
      %p130 = por %p128, %p129
      %p132 = scmp.ne.s32.totalorder %s115, %s131
      %p133 = scmp.eq.s32.totalorder %s18, 0
      %p134 = por %p132, %p133
      %p135 = scmp.le.s32.totalorder 1, %s12
      %p136 = scmp.lt.s32.totalorder %s12, 3
      %p137 = pnand %p135, %p136
      %p138 = pneg %p137
      // Predicated region
      $region9: #{tpu_custom_call.1} parent=5 // pred_check
        _
      $region10: #{tpu_custom_call.1} parent=5 // pred_check_branch
        %140 = sbr.rel (%p137) target = $region12
      $region11: #{tpu_custom_call.1} parent=5 // pred_region
        %s141 = ssub.s32 %s12, 1
        // Predicated region
        $region13: #{tpu_custom_call.1} parent=11 // pred_check
          %p142 = pneg %p73
        $region14: #{tpu_custom_call.1} parent=11 // pred_check_branch
          %144 = sbr.rel (%p142) target = $region16
        $region15: #{tpu_custom_call.1} parent=11 // pred_region
          _
        $region16: #{tpu_custom_call.1} parent=11 // pred_fallthru
          _
        // Predicated region
        $region17: #{tpu_custom_call.1} parent=11 // pred_check
          %p145 = pneg %p99
        $region18: #{tpu_custom_call.1} parent=11 // pred_check_branch
          %147 = sbr.rel (%p145) target = $region20
        $region19: #{tpu_custom_call.1} parent=11 // pred_region
          %p148 = scmp.lt.s32.totalorder %s21, 0
          %s149 = scalar_select %p148, %s21, 0
          %s150 = smul.addr %s149, 4
          %s151 = scalar_lea.vmem %s2, %s150
        $region20: #{tpu_custom_call.1} parent=11 // pred_fallthru
          _
      $region12: #{tpu_custom_call.1} parent=5 // pred_fallthru
        _
      %p152 = scmp.lt.s32.totalorder %s12, 2
      // Predicated region
      $region21: #{tpu_custom_call.1} parent=5 // pred_check
        %p153 = pneg %p152
      $region22: #{tpu_custom_call.1} parent=5 // pred_check_branch
        %155 = sbr.rel (%p153) target = $region24
      $region23: #{tpu_custom_call.1} parent=5 // pred_region
        // Predicated region
        $region25: #{tpu_custom_call.1} parent=23 // pred_check
          %p156 = pneg %p46
        $region26: #{tpu_custom_call.1} parent=23 // pred_check_branch
          %158 = sbr.rel (%p156) target = $region28
        $region27: #{tpu_custom_call.1} parent=23 // pred_region
          %p159 = scmp.lt.s32.totalorder %s20, 1
          %s160 = scalar_select %p159, %s20, 1
          %p161 = scmp.lt.s32.totalorder %s19, 0
          %s162 = scalar_select %p161, %s19, 0
          %s163 = smul.addr %s162, 2
          %s164 = smul.addr %s160, 2
          %s165 = sadd.s32 %s163, %s164
          %s166 = smul.addr %s165, 2
          %s167 = scalar_lea.vmem %s0, %s166
        $region28: #{tpu_custom_call.1} parent=23 // pred_fallthru
          _
      $region24: #{tpu_custom_call.1} parent=5 // pred_fallthru
        _
      %p168 = scmp.le.s32.totalorder 1, %s12
      %p169 = scmp.lt.s32.totalorder %s12, 3
      %p170 = pnand %p168, %p169
      %p171 = pneg %p170
      // Predicated region
      $region29: #{tpu_custom_call.1} parent=5 // pred_check
        _
      $region30: #{tpu_custom_call.1} parent=5 // pred_check_branch
        %173 = sbr.rel (%p170) target = $region32
      $region31: #{tpu_custom_call.1} parent=5 // pred_region
        %s174 = ssub.s32 %s12, 1
        %p175 = scmp.lt.s32.totalorder %s22, 1
        %s176 = scalar_select %p175, %s22, 1
        %p177 = scmp.lt.s32.totalorder %s21, 0
        %s178 = scalar_select %p177, %s21, 0
        %s179 = smul.addr %s178, 2
        %s180 = smul.addr %s176, 2
        %s181 = sadd.s32 %s179, %s180
        %s182 = smul.addr %s181, 2
        %s183 = scalar_lea.vmem %s0, %s182
        %p184 = pneg %p52
        %p185 = pneg %p49
        %p186 = pneg %p73
        %p187 = pneg %p70
        %p188 = scmp.lt.s32.totalorder %s21, 0
        %s189 = scalar_select %p188, %s21, 0
        %s190 = smul.addr %s189, 4
        %s191 = scalar_lea.vmem %s2, %s190
        %p192 = pneg %p99
        %p193 = pneg %p96
        %p194 = pneg %p127
        %p195 = pneg %p124
        %s196 = sand.u32 %s114, 1
        %s197 = scalar_lea.sflag [#allocation3], %s196
        %s198 = sand.u32 %s114, 1
        %s199 = smul.addr %s198, 4
        %s200 = scalar_lea.vmem [#allocation2], %s199
        %p201 = scmp.lt.s32.totalorder %s22, 1
        %s202 = scalar_select %p201, %s22, 1
        %p203 = scmp.lt.s32.totalorder %s21, 0
        %s204 = scalar_select %p203, %s21, 0
        %s205 = smul.addr %s204, 2
        %s206 = smul.addr %s202, 2
        %s207 = sadd.s32 %s205, %s206
        %s208 = smul.addr %s207, 2
        %s209 = scalar_lea.vmem %s0, %s208
        %p210 = scmp.lt.s32.totalorder %s21, 0
        %s211 = scalar_select %p210, %s21, 0
        %s212 = smul.addr %s211, 4
        %s213 = scalar_lea.vmem %s2, %s212
        %v214 = vld [vmem:[%s209] sm:$0xf]
        %v215 = vld [vmem:[%s1] sm:$0xf]
        %v216 = vld [vmem:[%s1 + $0x4] sm:$0xf]
        %v217 = vld [vmem:[%s1 + $0x8] sm:$0xf]
        %v218 = vld [vmem:[%s1 + $0xc] sm:$0xf]
        %v219 = vld [vmem:[%s1 + $0x10] sm:$0xf]
        %v220 = vld [vmem:[%s1 + $0x14] sm:$0xf]
        %v221 = vld [vmem:[%s1 + $0x18] sm:$0xf]
        %v222 = vld [vmem:[%s1 + $0x1c] sm:$0xf]
        %v223 = vld [vmem:[%s1 + $0x20] sm:$0xf]
        %v224 = vld [vmem:[%s1 + $0x24] sm:$0xf]
        %v225 = vld [vmem:[%s1 + $0x28] sm:$0xf]
        %v226 = vld [vmem:[%s1 + $0x2c] sm:$0xf]
        %v227 = vld [vmem:[%s1 + $0x30] sm:$0xf]
        %v228 = vld [vmem:[%s1 + $0x34] sm:$0xf]
        %v229 = vld [vmem:[%s1 + $0x38] sm:$0xf]
        %v230 = vld [vmem:[%s1 + $0x3c] sm:$0xf]
        %v231 = vld [vmem:[%s1 + $0x40] sm:$0xf]
        %v232 = vld [vmem:[%s1 + $0x44] sm:$0xf]
        %v233 = vld [vmem:[%s1 + $0x48] sm:$0xf]
        %v234 = vld [vmem:[%s1 + $0x4c] sm:$0xf]
        %v235 = vld [vmem:[%s1 + $0x50] sm:$0xf]
        %v236 = vld [vmem:[%s1 + $0x54] sm:$0xf]
        %v237 = vld [vmem:[%s1 + $0x58] sm:$0xf]
        %v238 = vld [vmem:[%s1 + $0x5c] sm:$0xf]
        %v239 = vld [vmem:[%s1 + $0x60] sm:$0xf]
        %v240 = vld [vmem:[%s1 + $0x64] sm:$0xf]
        %v241 = vld [vmem:[%s1 + $0x68] sm:$0xf]
        %v242 = vld [vmem:[%s1 + $0x6c] sm:$0xf]
        %v243 = vld [vmem:[%s1 + $0x70] sm:$0xf]
        %v244 = vld [vmem:[%s1 + $0x74] sm:$0xf]
        %v245 = vld [vmem:[%s1 + $0x78] sm:$0xf]
        %v246 = vld [vmem:[%s1 + $0x7c] sm:$0xf]
        %v247 = vld [vmem:[%s213] sm:$0xf]
        %249 = vst [vmem:[#allocation1] ss:$4 sm:$0xff] %v214
        %v250 = vld.sshfl [vmem:[#allocation1] sm:$0xff pattern:$0x73625140]
        %v251 = vld.sshfl [vmem:[#allocation1 + $0x8] sm:$0xff pattern:$0x73625140]
        %v286 = vunpack.c.l.b16 %v215
        %v287 = vunpack.c.l.b16 %v216
        %v288 = vunpack.c.l.b16 %v217
        %v289 = vunpack.c.l.b16 %v218
        %v290 = vunpack.c.l.b16 %v219
        %v291 = vunpack.c.l.b16 %v220
        %v292 = vunpack.c.l.b16 %v221
        %v293 = vunpack.c.l.b16 %v222
        %v294 = vunpack.c.l.b16 %v223
        %v295 = vunpack.c.l.b16 %v224
        %v296 = vunpack.c.l.b16 %v225
        %v297 = vunpack.c.l.b16 %v226
        %v298 = vunpack.c.l.b16 %v227
        %v299 = vunpack.c.l.b16 %v228
        %v300 = vunpack.c.l.b16 %v229
        %v301 = vunpack.c.l.b16 %v230
        %v302 = vunpack.c.l.b16 %v231
        %v303 = vunpack.c.l.b16 %v232
        %v304 = vunpack.c.l.b16 %v233
        %v305 = vunpack.c.l.b16 %v234
        %v306 = vunpack.c.l.b16 %v235
        %v307 = vunpack.c.l.b16 %v236
        %v308 = vunpack.c.l.b16 %v237
        %v309 = vunpack.c.l.b16 %v238
        %v310 = vunpack.c.l.b16 %v239
        %v311 = vunpack.c.l.b16 %v240
        %v312 = vunpack.c.l.b16 %v241
        %v313 = vunpack.c.l.b16 %v242
        %v314 = vunpack.c.l.b16 %v243
        %v315 = vunpack.c.l.b16 %v244
        %v316 = vunpack.c.l.b16 %v245
        %v317 = vunpack.c.l.b16 %v246
        %v318 = vpack.c.b16 %v287, %v286
        %v319 = vpack.c.b16 %v289, %v288
        %v320 = vpack.c.b16 %v291, %v290
        %v321 = vpack.c.b16 %v293, %v292
        %v322 = vpack.c.b16 %v295, %v294
        %v323 = vpack.c.b16 %v297, %v296
        %v324 = vpack.c.b16 %v299, %v298
        %v325 = vpack.c.b16 %v301, %v300
        %v326 = vpack.c.b16 %v303, %v302
        %v327 = vpack.c.b16 %v305, %v304
        %v328 = vpack.c.b16 %v307, %v306
        %v329 = vpack.c.b16 %v309, %v308
        %v330 = vpack.c.b16 %v311, %v310
        %v331 = vpack.c.b16 %v313, %v312
        %v332 = vpack.c.b16 %v315, %v314
        %v333 = vpack.c.b16 %v317, %v316
        %350 = vmatpush.bf16.msra.mxu0 %v325
        %351 = vmatpush.bf16.msra.mxu0 %v324
        %352 = vmatpush.bf16.msra.mxu0 %v323
        %353 = vmatpush.bf16.msra.mxu0 %v322
        %354 = vmatpush.bf16.msra.mxu0 %v321
        %355 = vmatpush.bf16.msra.mxu0 %v320
        %356 = vmatpush.bf16.msra.mxu0 %v319
        %357 = vmatpush.bf16.msra.mxu0 %v318
        %358 = vmatmul.bf16.gmra.mxu0 %v250
        %v359 = vpop.f32.mrf.mxu0
        %v360 = vadd.f32 %v247, %v359
        %v361 = vpop.f32.mrf.mxu0
        %362 = vdwg.mxu0
        %363 = vmatpush.bf16.msra.mxu0 %v333
        %364 = vmatpush.bf16.msra.mxu0 %v332
        %365 = vmatpush.bf16.msra.mxu0 %v331
        %366 = vmatpush.bf16.msra.mxu0 %v330
        %367 = vmatpush.bf16.msra.mxu0 %v329
        %368 = vmatpush.bf16.msra.mxu0 %v328
        %369 = vmatpush.bf16.msra.mxu0 %v327
        %370 = vmatpush.bf16.msra.mxu0 %v326
        %371 = vmatmul.bf16.gmra.mxu0 %v251
        %v372 = vpop.f32.mrf.mxu0
        %v373 = vadd.f32 %v360, %v372
        %v374 = vpop.f32.mrf.mxu0
        %375 = vdwg.mxu0
        %vm376 = vcmask 257024
        %377 = vst.msk [vmem:[%s200] sm:$0xf] %vm376, %v373
        %s378 = sand.u32 %s114, 1
        %s379 = scalar_lea.sflag [#allocation3], %s378
        %s380 = sand.u32 %s114, 1
        %s381 = smul.addr %s380, 4
        %s382 = scalar_lea.vmem [#allocation2], %s381
        // Predicated region
        $region33: #{tpu_custom_call.1} parent=31 // pred_check
          %p383 = pneg %p124
        $region34: #{tpu_custom_call.1} parent=31 // pred_check_branch
          %385 = sbr.rel (%p383) target = $region36
        $region35: #{tpu_custom_call.1} parent=31 // pred_region
          %387 = vsyncadd %s379, 0
          %s388 = sadd.s32 %s21, %s22
          %s389 = smul.addr %s388, 4
          %s390 = scalar_lea.hbm %s3, %s389
          %s392 = sshll.u32 %s382, 4
          %s393 = int_to_ptr.vmem [resolvable:$true] %s392
          %s394 = sshll.u32 %s390, 4
          %s395 = int_to_ptr.hbm [resolvable:$true] %s394
          %397 = dma.vmem_to_hbm [thread:$0]  %s393, 64, %s395, %s379
        $region36: #{tpu_custom_call.1} parent=31 // pred_fallthru
          _
      $region32: #{tpu_custom_call.1} parent=5 // pred_fallthru
        _
      %p398 = scmp.le.s32.totalorder 2, %s12
      // Predicated region
      $region37: #{tpu_custom_call.1} parent=5 // pred_check
        %p399 = pneg %p398
      $region38: #{tpu_custom_call.1} parent=5 // pred_check_branch
        %401 = sbr.rel (%p399) target = $region40
      $region39: #{tpu_custom_call.1} parent=5 // pred_region
        %s402 = ssub.s32 %s12, 2
        // Predicated region
        $region41: #{tpu_custom_call.1} parent=39 // pred_check
          %p403 = pneg %p130
        $region42: #{tpu_custom_call.1} parent=39 // pred_check_branch
          %405 = sbr.rel (%p403) target = $region44
        $region43: #{tpu_custom_call.1} parent=39 // pred_region
          %s406 = sand.u32 %s115, 1
          %s407 = scalar_lea.sflag [#allocation3], %s406
          %s408 = sand.u32 %s115, 1
          %s409 = smul.addr %s408, 4
          %s410 = scalar_lea.vmem [#allocation2], %s409
          %412 = dma.done %s407, 64
        $region44: #{tpu_custom_call.1} parent=39 // pred_fallthru
          _
      $region40: #{tpu_custom_call.1} parent=5 // pred_fallthru
        _
    $region6: #{tpu_custom_call.1} parent=1 // loop_footer
      %s16 = sadd.s32 1, %s12
    $region7: #{tpu_custom_call.1} parent=1 // loop_footer_branch
      %11 = sbr.rel target = $region3
    $region8: #{tpu_custom_call.1} parent=1 // loop_exit
      _
    %413 = vsyncpa [#allocation3], 1
    %s414 = scalar_lea.sflag [#allocation3], 1
    %415 = vsyncpa %s414, 1

</llo_original>
